<compile_context>
chip_gen: v5e
topology: v5e:2x2
jax: 0.10.0
libtpu: 0.0.40
codegen_flags: <defaults>
</compile_context>

<pallas_src>
import math

import jax
import jax.numpy as jnp
from jax.experimental import pallas as pl
from jax.experimental.pallas import tpu as pltpu


def _round_up(a: int, b: int) -> int:
    return (a + b - 1) // b * b


def _global_net_kernel(x_ref, w_ref, b_ref, o_ref, acc_ref):
    # x_ref: (B_pad, tk)    w_ref: (tn, tk)    b_ref: (1, tn)
    # o_ref: (B_pad, tn)    acc_ref: (B_pad, tn) f32 scratch (resident over K)
    k = pl.program_id(1)

    @pl.when(k == 0)
    def _():
        acc_ref[...] = jnp.zeros_like(acc_ref)

    # Contract x's last dim with the weight's last dim (untransposed
    # nn.Linear layout) -> (B_pad, tn) on the MXU, f32 accumulation.
    acc_ref[...] += jax.lax.dot_general(
        x_ref[...], w_ref[...],
        dimension_numbers=(((1,), (1,)), ((), ())),
        preferred_element_type=jnp.float32,
    )

    @pl.when(k == pl.num_programs(1) - 1)
    def _():
        o_ref[...] = (acc_ref[...] + b_ref[...]).astype(o_ref.dtype)


def global_net_forward(x, weight, bias, *, tk=512, tn=128):
    """
    x:      (B, C, H, W) float32          (NCHW, like PyTorch)
    weight: (class_num, input_size) f32   (PyTorch nn.Linear layout, NOT transposed)
    bias:   (class_num,) float32
    returns (B, class_num) float32  ==  x.reshape(B, -1) @ weight.T + bias
    """
    B = x.shape[0]
    input_size = math.prod(x.shape[1:])
    class_num = weight.shape[0]

    x_flat = x.reshape(B, input_size)

    # Padded / tiled sizes: sublane-aligned batch, lane-dense N (multiple of
    # 128), K tiled in multiples of 128 so every block is (8,128)-legal.
    B_pad = _round_up(max(B, 8), 8)
    tn = min(_round_up(tn, 128), _round_up(class_num, 128))
    N_pad = _round_up(class_num, tn)
    tk = min(_round_up(tk, 128), _round_up(input_size, 128))
    K_pad = _round_up(input_size, tk)

    if (B_pad, K_pad) != (B, input_size):
        x_flat = jnp.pad(x_flat, ((0, B_pad - B), (0, K_pad - input_size)))
    w = weight
    if (N_pad, K_pad) != (class_num, input_size):
        # TODO(synk): in a real model, store the parameter pre-padded so this
        # zero-pad copy is not paid on every call.
        w = jnp.pad(w, ((0, N_pad - class_num), (0, K_pad - input_size)))
    b2d = bias.reshape(1, class_num)
    if N_pad != class_num:
        b2d = jnp.pad(b2d, ((0, 0), (0, N_pad - class_num)))

    grid = (N_pad // tn, K_pad // tk)

    out = pl.pallas_call(
        _global_net_kernel,
        out_shape=jax.ShapeDtypeStruct((B_pad, N_pad), x.dtype),
        grid_spec=pltpu.PrefetchScalarGridSpec(
            num_scalar_prefetch=0,
            grid=grid,
            in_specs=[
                pl.BlockSpec((B_pad, tk), lambda n, k: (0, k)),   # activations
                pl.BlockSpec((tn, tk), lambda n, k: (n, k)),       # weight (N, K)
                pl.BlockSpec((1, tn), lambda n, k: (0, n)),        # bias
            ],
            out_specs=pl.BlockSpec((B_pad, tn), lambda n, k: (0, n)),
            scratch_shapes=[pltpu.VMEM((B_pad, tn), jnp.float32)],
        ),
        compiler_params=pltpu.CompilerParams(
            # N tiles are independent (sharded across TCs on v7x); K is the
            # resident-accumulator reduction axis -> "arbitrary", last.
            dimension_semantics=("parallel", "arbitrary"),
        ),
    )(x_flat, w, b2d)

    return out[:B, :class_num]


if __name__ == "__main__":
    # Small shapes consistent with the module's forward:
    #   x: (B=2, C=4, H=16, W=16)  ->  input_size = 4*16*16 = 1024
    #   class_num = 64
    key = jax.random.PRNGKey(0)
    kx, kw, kb = jax.random.split(key, 3)

    B, C, H, W = 2, 4, 16, 16
    input_size = C * H * W
    class_num = 64

    x = jax.random.normal(kx, (B, C, H, W), dtype=jnp.float32)
    # Deterministic init mimicking nn.Linear's uniform(-1/sqrt(fan_in), 1/sqrt(fan_in))
    bound = 1.0 / math.sqrt(input_size)
    weight = jax.random.uniform(kw, (class_num, input_size), dtype=jnp.float32,
                                minval=-bound, maxval=bound)
    bias = jax.random.uniform(kb, (class_num,), dtype=jnp.float32,
                              minval=-bound, maxval=bound)

    out = jax.block_until_ready(global_net_forward(x, weight, bias))

    # Cross-check against plain-JAX reference of the PyTorch forward.
    ref = x.reshape(B, -1) @ weight.T + bias
    assert out.shape == (B, class_num)
    assert jnp.allclose(out, ref, atol=1e-4, rtol=1e-4)

    print("KERNEL_OK")
</pallas_src>

<mosaic_0001>
module attributes {stable_mosaic.version = 11 : i64} {
  func.func @_global_net_kernel(%arg0: i32, %arg1: i32, %arg2: memref<8x512xf32, #tpu.memory_space<vmem>>, %arg3: memref<128x512xf32, #tpu.memory_space<vmem>>, %arg4: memref<1x128xf32, #tpu.memory_space<vmem>>, %arg5: memref<8x128xf32, #tpu.memory_space<vmem>>, %arg6: memref<8x128xf32, #tpu.memory_space<vmem>>) attributes {dimension_semantics = [#tpu.dimension_semantics<parallel>, #tpu.dimension_semantics<arbitrary>], iteration_bounds = array<i64: 1, 2>, scalar_prefetch = 0 : i64, scratch_operands = 1 : i64, tpu.core_type = #tpu.core_type<tc>, window_params = [{transform_indices = @transform_0, window_bounds = array<i64: 8, 512>}, {transform_indices = @transform_1, window_bounds = array<i64: 128, 512>}, {transform_indices = @transform_2, window_bounds = array<i64: 1, 128>}, {transform_indices = @transform_3, window_bounds = array<i64: 8, 128>}]} {
    %c0_i32 = arith.constant 0 : i32
    %0 = arith.cmpi eq, %arg1, %c0_i32 : i32
    %1 = arith.extui %0 : i1 to i32
    %c0_i32_0 = arith.constant 0 : i32
    %2 = arith.cmpi ne, %1, %c0_i32_0 : i32
    scf.if %2 {
      %cst_9 = arith.constant 0.000000e+00 : f32
      %12 = vector.broadcast %cst_9 : f32 to vector<8x128xf32>
      %c0_10 = arith.constant 0 : index
      %c0_11 = arith.constant 0 : index
      %13 = vector.load %arg6[%c0_10, %c0_11] : memref<8x128xf32, #tpu.memory_space<vmem>>, vector<8x128xf32>
      tpu.vector_store %arg6[%c0_10, %c0_11], %12 {strides = array<i32>} : memref<8x128xf32, #tpu.memory_space<vmem>>, vector<8x128xf32>,
    } else {
    }
    %c0 = arith.constant 0 : index
    %c0_1 = arith.constant 0 : index
    %3 = vector.load %arg6[%c0, %c0_1] : memref<8x128xf32, #tpu.memory_space<vmem>>, vector<8x128xf32>
    %c0_2 = arith.constant 0 : index
    %c0_3 = arith.constant 0 : index
    %4 = vector.load %arg2[%c0_2, %c0_3] : memref<8x512xf32, #tpu.memory_space<vmem>>, vector<8x512xf32>
    %c0_4 = arith.constant 0 : index
    %c0_5 = arith.constant 0 : index
    %5 = vector.load %arg3[%c0_4, %c0_5] : memref<128x512xf32, #tpu.memory_space<vmem>>, vector<128x512xf32>
    %cst = arith.constant dense<0.000000e+00> : vector<8x128xf32>
    %6 = tpu.matmul %4, %5, %cst {dimension_numbers = #tpu.dot_dimension_numbers<[1], [1], [0], [0], [0, 0, 1, 0], [], []>} : vector<8x512xf32>, vector<128x512xf32>, vector<8x128xf32> -> vector<8x128xf32>
    %7 = arith.addf %3, %6 : vector<8x128xf32>
    %c0_6 = arith.constant 0 : index
    %c0_7 = arith.constant 0 : index
    %8 = vector.load %arg6[%c0_6, %c0_7] : memref<8x128xf32, #tpu.memory_space<vmem>>, vector<8x128xf32>
    tpu.vector_store %arg6[%c0_6, %c0_7], %7 {strides = array<i32>} : memref<8x128xf32, #tpu.memory_space<vmem>>, vector<8x128xf32>,
    %c1_i32 = arith.constant 1 : i32
    %9 = arith.cmpi eq, %arg1, %c1_i32 : i32
    %10 = arith.extui %9 : i1 to i32
    %c0_i32_8 = arith.constant 0 : i32
    %11 = arith.cmpi ne, %10, %c0_i32_8 : i32
    scf.if %11 {
      %c0_9 = arith.constant 0 : index
      %c0_10 = arith.constant 0 : index
      %12 = vector.load %arg6[%c0_9, %c0_10] : memref<8x128xf32, #tpu.memory_space<vmem>>, vector<8x128xf32>
      %c0_11 = arith.constant 0 : index
      %c0_12 = arith.constant 0 : index
      %13 = vector.load %arg4[%c0_11, %c0_12] : memref<1x128xf32, #tpu.memory_space<vmem>>, vector<1x128xf32>
      %14 = vector.broadcast %13 : vector<1x128xf32> to vector<8x128xf32>
      %15 = arith.addf %12, %14 : vector<8x128xf32>
      %c0_13 = arith.constant 0 : index
      %c0_14 = arith.constant 0 : index
      %16 = vector.load %arg5[%c0_13, %c0_14] : memref<8x128xf32, #tpu.memory_space<vmem>>, vector<8x128xf32>
      tpu.vector_store %arg5[%c0_13, %c0_14], %15 {strides = array<i32>} : memref<8x128xf32, #tpu.memory_space<vmem>>, vector<8x128xf32>,
    } else {
    }
    return
  }
  func.func @transform_0(%arg0: i32, %arg1: i32) -> (i32, i32) {
    %c0_i32 = arith.constant 0 : i32
    %c0_i32_0 = arith.constant 0 : i32
    return %c0_i32, %arg1 : i32, i32
  }
  func.func @transform_1(%arg0: i32, %arg1: i32) -> (i32, i32) {
    %c0_i32 = arith.constant 0 : i32
    return %arg0, %arg1 : i32, i32
  }
  func.func @transform_2(%arg0: i32, %arg1: i32) -> (i32, i32) {
    %c0_i32 = arith.constant 0 : i32
    %c0_i32_0 = arith.constant 0 : i32
    return %c0_i32, %arg0 : i32, i32
  }
  func.func @transform_3(%arg0: i32, %arg1: i32) -> (i32, i32) {
    %c0_i32 = arith.constant 0 : i32
    %c0_i32_0 = arith.constant 0 : i32
    return %c0_i32, %arg0 : i32, i32
  }
}

</mosaic_0001>

<llo_original>
// kernel: tpu_custom_call.1
$region0: #{tpu_custom_call.1}
  #allocation0 [shape = 'u32[]', space=smem, size = 0x4, offset = 0x4, fixed_abs, tag = 'smem constant byte address 0x4 - core index']
  #allocation1 [shape = 'u32[72,128]{1,0:T(1,128)}', space=vmem, size = 0x9000, scoped, tag = 'internal scratch']
  #allocation2 [shape = 'f32[8,128]{1,0:T(8,128)}', space=vmem, size = 0x1000, scoped, tag = 'scratch operand']
  %s0 = inlined_call_operand.hbm [shape: f32[8,1024], index: 0, kind: input, shape index: {}]
  %s1 = inlined_call_operand.hbm [shape: f32[128,1024], index: 1, kind: input, shape index: {}]
  %s2 = inlined_call_operand.vmem [shape: f32[1,128], index: 2, kind: input, shape index: {}]
  %s3 = inlined_call_operand.hbm [shape: f32[8,128], index: 3, kind: output, shape index: {}]
  %s4 = sld [smem:[#allocation0]]
  $region61: #{tpu_custom_call.1} parent=0
    _
  %s6 = ssub.s32 1, %s4
  %s7 = scalar_select 0, %s6, %s4
  $region1: #{tpu_custom_call.1} parent=0
    #allocation3 [shape = 'u8[32768]{0}', space=vmem, size = 0x8000, scoped, tag = 'input window, operand 0']
    #allocation4 [shape = 's32[2]{0}', space=sflag, size = 0x8, scoped, tag = 'scoped memory for tpu_custom_call.1']
    #allocation5 [shape = 's32[2]{0}', space=sflag, size = 0x8, scoped, tag = 'scoped memory for tpu_custom_call.1']
    #allocation6 [shape = 'u8[524288]{0}', space=vmem, size = 0x80000, scoped, tag = 'input window, operand 1']
    #allocation7 [shape = 's32[2]{0}', space=sflag, size = 0x8, scoped, tag = 'scoped memory for tpu_custom_call.1']
    #allocation8 [shape = 'u8[4096]{0}', space=vmem, size = 0x1000, scoped, tag = 'output window, operand 0, single buffered']
    %8 = vsyncpa [#allocation4], 0
    %s9 = scalar_lea.sflag [#allocation4], 1
    %10 = vsyncpa %s9, 0
    %11 = vsyncpa [#allocation7], 0
    %s12 = scalar_lea.sflag [#allocation7], 1
    %13 = vsyncpa %s12, 0
    %14 = vsyncpa [#allocation5], 0
    loop: start=0, step=1, limit=4
    $region2: #{tpu_custom_call.1} parent=1 // loop_pre_header
      _
    $region3: #{tpu_custom_call.1} parent=1 // loop_header
      %s16 = sphi 0, %s20
      %p17 = scmp.ge.s32.totalorder %s16, 4
      %s23 = sphi 0, %s35
      %s24 = sphi 0, %s31
      %s25 = sphi 0, %s23
      %s26 = sphi 0, %s24
      %s27 = sphi 0, %s25
      %s28 = sphi 0, %s26
      %s38 = sphi 0, %s40
      %s41 = sphi 0, %s38
      %s42 = sphi 0, %s41
      %s58 = sphi 0, %s42
      %s66 = sphi 0, %s68
      %s69 = sphi 0, %s66
      %s70 = sphi 0, %s69
      %s86 = sphi 0, %s70
      %s92 = sphi 0, %s94
      %s95 = sphi 0, %s92
      %s96 = sphi 0, %s95
      %s112 = sphi 0, %s96
      %s118 = sphi 0, %s120
      %s121 = sphi 0, %s118
      %s122 = sphi 0, %s121
      %s138 = sphi 0, %s122
    $region4: #{tpu_custom_call.1} parent=1 // loop_header_branch
      %19 = sbr.rel (%p17) target = $region8
    $region5: #{tpu_custom_call.1} parent=1 // loop_body
      %s21 = ssub.s32 %s16, 1
      %s22 = ssub.s32 %s16, 2
      %s29 = sadd.s32 1, %s24
      %p30 = scmp.ge.s32.totalorder %s29, 2
      %s31 = scalar_select %p30, 0, %s29
      %s32 = sadd.s32 1, %s23
      %s33 = scalar_select %p30, %s32, %s23
      %p34 = scmp.ge.s32.totalorder %s33, 1
      %s35 = scalar_select %p34, 0, %s33
      %s36 = ssub.s32 %s24, %s31
      %p37 = scmp.eq.s32.totalorder %s36, 0
      %s39 = sadd.s32 %s38, 1
      %s40 = scalar_select %p37, %s38, %s39
      %p43 = pneg %p37
      %p44 = scmp.eq.s32.totalorder %s16, 1
      %p45 = por %p43, %p44
      %p46 = scmp.ne.s32.totalorder %s38, %s41
      %p47 = scmp.eq.s32.totalorder %s16, 0
      %p48 = por %p46, %p47
      %p49 = scmp.ne.s32.totalorder %s38, %s41
      %p50 = scmp.eq.s32.totalorder %s21, 1
      %p51 = por %p49, %p50
      %p52 = scmp.ne.s32.totalorder %s41, %s42
      %p53 = scmp.eq.s32.totalorder %s21, 0
      %p54 = por %p52, %p53
      %p55 = scmp.ne.s32.totalorder %s41, %s42
      %p56 = scmp.eq.s32.totalorder %s22, 1
      %p57 = por %p55, %p56
      %p59 = scmp.ne.s32.totalorder %s42, %s58
      %p60 = scmp.eq.s32.totalorder %s22, 0
      %p61 = por %p59, %p60
      %s62 = ssub.s32 %s23, %s35
      %s63 = ssub.s32 %s24, %s31
      %s64 = sor.u32 %s62, %s63
      %p65 = scmp.eq.s32.totalorder %s64, 0
      %s67 = sadd.s32 %s66, 1
      %s68 = scalar_select %p65, %s66, %s67
      %p71 = pneg %p65
      %p72 = scmp.eq.s32.totalorder %s16, 1
      %p73 = por %p71, %p72
      %p74 = scmp.ne.s32.totalorder %s66, %s69
      %p75 = scmp.eq.s32.totalorder %s16, 0
      %p76 = por %p74, %p75
      %p77 = scmp.ne.s32.totalorder %s66, %s69
      %p78 = scmp.eq.s32.totalorder %s21, 1
      %p79 = por %p77, %p78
      %p80 = scmp.ne.s32.totalorder %s69, %s70
      %p81 = scmp.eq.s32.totalorder %s21, 0
      %p82 = por %p80, %p81
      %p83 = scmp.ne.s32.totalorder %s69, %s70
      %p84 = scmp.eq.s32.totalorder %s22, 1
      %p85 = por %p83, %p84
      %p87 = scmp.ne.s32.totalorder %s70, %s86
      %p88 = scmp.eq.s32.totalorder %s22, 0
      %p89 = por %p87, %p88
      %s90 = ssub.s32 %s23, %s35
      %p91 = scmp.eq.s32.totalorder %s90, 0
      %s93 = sadd.s32 %s92, 1
      %s94 = scalar_select %p91, %s92, %s93
      %p97 = pneg %p91
      %p98 = scmp.eq.s32.totalorder %s16, 1
      %p99 = por %p97, %p98
      %p100 = scmp.ne.s32.totalorder %s92, %s95
      %p101 = scmp.eq.s32.totalorder %s16, 0
      %p102 = por %p100, %p101
      %p103 = scmp.ne.s32.totalorder %s92, %s95
      %p104 = scmp.eq.s32.totalorder %s21, 1
      %p105 = por %p103, %p104
      %p106 = scmp.ne.s32.totalorder %s95, %s96
      %p107 = scmp.eq.s32.totalorder %s21, 0
      %p108 = por %p106, %p107
      %p109 = scmp.ne.s32.totalorder %s95, %s96
      %p110 = scmp.eq.s32.totalorder %s22, 1
      %p111 = por %p109, %p110
      %p113 = scmp.ne.s32.totalorder %s96, %s112
      %p114 = scmp.eq.s32.totalorder %s22, 0
      %p115 = por %p113, %p114
      %s116 = ssub.s32 %s23, %s35
      %p117 = scmp.eq.s32.totalorder %s116, 0
      %s119 = sadd.s32 %s118, 1
      %s120 = scalar_select %p117, %s118, %s119
      %p123 = pneg %p117
      %p124 = scmp.eq.s32.totalorder %s16, 1
      %p125 = por %p123, %p124
      %p126 = scmp.ne.s32.totalorder %s118, %s121
      %p127 = scmp.eq.s32.totalorder %s16, 0
      %p128 = por %p126, %p127
      %p129 = scmp.ne.s32.totalorder %s118, %s121
      %p130 = scmp.eq.s32.totalorder %s21, 1
      %p131 = por %p129, %p130
      %p132 = scmp.ne.s32.totalorder %s121, %s122
      %p133 = scmp.eq.s32.totalorder %s21, 0
      %p134 = por %p132, %p133
      %p135 = scmp.ne.s32.totalorder %s121, %s122
      %p136 = scmp.eq.s32.totalorder %s22, 1
      %p137 = por %p135, %p136
      %p139 = scmp.ne.s32.totalorder %s122, %s138
      %p140 = scmp.eq.s32.totalorder %s22, 0
      %p141 = por %p139, %p140
      %p142 = scmp.le.s32.totalorder 1, %s16
      %p143 = scmp.lt.s32.totalorder %s16, 3
      %p144 = pnand %p142, %p143
      %p145 = pneg %p144
      // Predicated region
      $region9: #{tpu_custom_call.1} parent=5 // pred_check
        _
      $region10: #{tpu_custom_call.1} parent=5 // pred_check_branch
        %147 = sbr.rel (%p144) target = $region12
      $region11: #{tpu_custom_call.1} parent=5 // pred_region
        %s148 = ssub.s32 %s16, 1
        // Predicated region
        $region13: #{tpu_custom_call.1} parent=11 // pred_check
          %p149 = pneg %p108
        $region14: #{tpu_custom_call.1} parent=11 // pred_check_branch
          %151 = sbr.rel (%p149) target = $region16
        $region15: #{tpu_custom_call.1} parent=11 // pred_region
          %p152 = scmp.lt.s32.totalorder %s25, 0
          %s153 = scalar_select %p152, %s25, 0
          %s154 = scalar_lea.vmem %s2, %s153
        $region16: #{tpu_custom_call.1} parent=11 // pred_fallthru
          _
      $region12: #{tpu_custom_call.1} parent=5 // pred_fallthru
        _
      %p155 = scmp.lt.s32.totalorder %s16, 2
      // Predicated region
      $region17: #{tpu_custom_call.1} parent=5 // pred_check
        %p156 = pneg %p155
      $region18: #{tpu_custom_call.1} parent=5 // pred_check_branch
        %158 = sbr.rel (%p156) target = $region20
      $region19: #{tpu_custom_call.1} parent=5 // pred_region
        // Predicated region
        $region21: #{tpu_custom_call.1} parent=19 // pred_check
          %p159 = pneg %p48
        $region22: #{tpu_custom_call.1} parent=19 // pred_check_branch
          %161 = sbr.rel (%p159) target = $region24
        $region23: #{tpu_custom_call.1} parent=19 // pred_region
          %s162 = sand.u32 %s38, 1
          %s163 = scalar_lea.sflag [#allocation4], %s162
          %s164 = sand.u32 %s38, 1
          %s165 = smul.addr %s164, 32
          %s166 = scalar_lea.vmem [#allocation3], %s165
          %s167 = smul.u32 4, %s24
          %169 = vsyncadd %s163, 0
          %s170 = smul.addr %s167, 8
          %s171 = scalar_lea.hbm %s0, %s170
          %s173 = sshll.u32 %s171, 4
          %s174 = int_to_ptr.hbm [resolvable:$true] %s173
          %s175 = sshll.u32 %s166, 4
          %s176 = int_to_ptr.vmem [resolvable:$true] %s175
          %178 = dma.hbm_to_vmem [thread:$0]  %s174, 512, %s176, %s163
        $region24: #{tpu_custom_call.1} parent=19 // pred_fallthru
          _
        // Predicated region
        $region25: #{tpu_custom_call.1} parent=19 // pred_check
          %p179 = pneg %p76
        $region26: #{tpu_custom_call.1} parent=19 // pred_check_branch
          %181 = sbr.rel (%p179) target = $region28
        $region27: #{tpu_custom_call.1} parent=19 // pred_region
          %s182 = sand.u32 %s66, 1
          %s183 = scalar_lea.sflag [#allocation7], %s182
          %s184 = sand.u32 %s66, 1
          %s185 = smul.addr %s184, 512
          %s186 = scalar_lea.vmem [#allocation6], %s185
          %s187 = smul.u32 16, %s23
          %s188 = smul.u32 4, %s24
          %190 = vsyncadd %s183, 0
          %s191 = smul.addr %s187, 8
          %s192 = sadd.s32 %s188, %s191
          %s193 = smul.addr %s192, 8
          %s194 = scalar_lea.hbm %s1, %s193
          %s195 = sshll.u32 %s194, 4
          %s196 = int_to_ptr.hbm [resolvable:$true] %s195
          %s197 = sshll.u32 %s186, 4
          %s198 = int_to_ptr.vmem [resolvable:$true] %s197
          %203 = dma.hbm_to_vmem [thread:$0]  %s196, 8192, %s198, %s183, 1024, 512, 32
        $region28: #{tpu_custom_call.1} parent=19 // pred_fallthru
          _
      $region20: #{tpu_custom_call.1} parent=5 // pred_fallthru
        _
      %p204 = scmp.le.s32.totalorder 1, %s16
      %p205 = scmp.lt.s32.totalorder %s16, 3
      %p206 = pnand %p204, %p205
      %p207 = pneg %p206
      // Predicated region
      $region29: #{tpu_custom_call.1} parent=5 // pred_check
        _
      $region30: #{tpu_custom_call.1} parent=5 // pred_check_branch
        %209 = sbr.rel (%p206) target = $region32
      $region31: #{tpu_custom_call.1} parent=5 // pred_region
        %s210 = ssub.s32 %s16, 1
        %s211 = sand.u32 %s41, 1
        %s212 = scalar_lea.sflag [#allocation4], %s211
        %s213 = sand.u32 %s41, 1
        %s214 = smul.addr %s213, 32
        %s215 = scalar_lea.vmem [#allocation3], %s214
        // Predicated region
        $region33: #{tpu_custom_call.1} parent=31 // pred_check
          %p216 = pneg %p54
        $region34: #{tpu_custom_call.1} parent=31 // pred_check_branch
          %218 = sbr.rel (%p216) target = $region36
        $region35: #{tpu_custom_call.1} parent=31 // pred_region
          %220 = dma.done %s212, 512
        $region36: #{tpu_custom_call.1} parent=31 // pred_fallthru
          _
        %s221 = sand.u32 %s69, 1
        %s222 = scalar_lea.sflag [#allocation7], %s221
        %s223 = sand.u32 %s69, 1
        %s224 = smul.addr %s223, 512
        %s225 = scalar_lea.vmem [#allocation6], %s224
        // Predicated region
        $region37: #{tpu_custom_call.1} parent=31 // pred_check
          %p226 = pneg %p82
        $region38: #{tpu_custom_call.1} parent=31 // pred_check_branch
          %228 = sbr.rel (%p226) target = $region40
        $region39: #{tpu_custom_call.1} parent=31 // pred_region
          %230 = dma.done %s222, 8192
        $region40: #{tpu_custom_call.1} parent=31 // pred_fallthru
          _
        %s231 = sand.u32 %s41, 1
        %s232 = scalar_lea.sflag [#allocation4], %s231
        %s233 = sand.u32 %s41, 1
        %s234 = smul.addr %s233, 32
        %s235 = scalar_lea.vmem [#allocation3], %s234
        %p236 = pneg %p54
        %p237 = pneg %p51
        %s238 = sand.u32 %s69, 1
        %s239 = scalar_lea.sflag [#allocation7], %s238
        %s240 = sand.u32 %s69, 1
        %s241 = smul.addr %s240, 512
        %s242 = scalar_lea.vmem [#allocation6], %s241
        %p243 = pneg %p82
        %p244 = pneg %p79
        %p245 = scmp.lt.s32.totalorder %s25, 0
        %s246 = scalar_select %p245, %s25, 0
        %s247 = scalar_lea.vmem %s2, %s246
        %p248 = pneg %p108
        %p249 = pneg %p105
        %p250 = pneg %p134
        %p251 = pneg %p131
        %s252 = smul.u32 4, %s26
        %s253 = smul.u32 16, %s25
        %s254 = smul.u32 4, %s26
        %p255 = scmp.lt.s32.totalorder %s25, 0
        %s256 = scalar_select %p255, %s25, 0
        %s257 = scalar_lea.vmem %s2, %s256
        %p258 = scmp.eq.s32.totalorder %s26, 0
        // Predicated region
        $region41: #{tpu_custom_call.1} parent=31 // pred_check
          %p259 = pneg %p258
        $region42: #{tpu_custom_call.1} parent=31 // pred_check_branch
          %261 = sbr.rel (%p259) target = $region44
        $region43: #{tpu_custom_call.1} parent=31 // pred_region
          %262 = vst [vmem:[#allocation2] sm:$0xff] 0.0
        $region44: #{tpu_custom_call.1} parent=31 // pred_fallthru
          _
        %v263 = vld [vmem:[#allocation2] sm:$0xff]
        %v264 = vld [vmem:[%s215] sm:$0xff]
        %v265 = vld [vmem:[%s215 + $0x8] sm:$0xff]
        %v266 = vld [vmem:[%s215 + $0x10] sm:$0xff]
        %v267 = vld [vmem:[%s215 + $0x18] sm:$0xff]
        %v268 = vld [vmem:[%s225] sm:$0xff]
        %v269 = vld [vmem:[%s225 + $0x8] sm:$0xff]
        %v270 = vld [vmem:[%s225 + $0x10] sm:$0xff]
        %v271 = vld [vmem:[%s225 + $0x18] sm:$0xff]
        %v272 = vld [vmem:[%s225 + $0x20] sm:$0xff]
        %v273 = vld [vmem:[%s225 + $0x28] sm:$0xff]
        %v274 = vld [vmem:[%s225 + $0x30] sm:$0xff]
        %v275 = vld [vmem:[%s225 + $0x38] sm:$0xff]
        %v276 = vld [vmem:[%s225 + $0x40] sm:$0xff]
        %v277 = vld [vmem:[%s225 + $0x48] sm:$0xff]
        %v278 = vld [vmem:[%s225 + $0x50] sm:$0xff]
        %v279 = vld [vmem:[%s225 + $0x58] sm:$0xff]
        %v280 = vld [vmem:[%s225 + $0x60] sm:$0xff]
        %v281 = vld [vmem:[%s225 + $0x68] sm:$0xff]
        %v282 = vld [vmem:[%s225 + $0x70] sm:$0xff]
        %v283 = vld [vmem:[%s225 + $0x78] sm:$0xff]
        %v284 = vld [vmem:[%s225 + $0x80] sm:$0xff]
        %v285 = vld [vmem:[%s225 + $0x88] sm:$0xff]
        %v286 = vld [vmem:[%s225 + $0x90] sm:$0xff]
        %v287 = vld [vmem:[%s225 + $0x98] sm:$0xff]
        %v288 = vld [vmem:[%s225 + $0xa0] sm:$0xff]
        %v289 = vld [vmem:[%s225 + $0xa8] sm:$0xff]
        %v290 = vld [vmem:[%s225 + $0xb0] sm:$0xff]
        %v291 = vld [vmem:[%s225 + $0xb8] sm:$0xff]
        %v292 = vld [vmem:[%s225 + $0xc0] sm:$0xff]
        %v293 = vld [vmem:[%s225 + $0xc8] sm:$0xff]
        %v294 = vld [vmem:[%s225 + $0xd0] sm:$0xff]
        %v295 = vld [vmem:[%s225 + $0xd8] sm:$0xff]
        %v296 = vld [vmem:[%s225 + $0xe0] sm:$0xff]
        %v297 = vld [vmem:[%s225 + $0xe8] sm:$0xff]
        %v298 = vld [vmem:[%s225 + $0xf0] sm:$0xff]
        %v299 = vld [vmem:[%s225 + $0xf8] sm:$0xff]
        %v300 = vld [vmem:[%s225 + $0x100] sm:$0xff]
        %v301 = vld [vmem:[%s225 + $0x108] sm:$0xff]
        %v302 = vld [vmem:[%s225 + $0x110] sm:$0xff]
        %v303 = vld [vmem:[%s225 + $0x118] sm:$0xff]
        %v304 = vld [vmem:[%s225 + $0x120] sm:$0xff]
        %v305 = vld [vmem:[%s225 + $0x128] sm:$0xff]
        %v306 = vld [vmem:[%s225 + $0x130] sm:$0xff]
        %v307 = vld [vmem:[%s225 + $0x138] sm:$0xff]
        %v308 = vld [vmem:[%s225 + $0x140] sm:$0xff]
        %v309 = vld [vmem:[%s225 + $0x148] sm:$0xff]
        %v310 = vld [vmem:[%s225 + $0x150] sm:$0xff]
        %v311 = vld [vmem:[%s225 + $0x158] sm:$0xff]
        %v312 = vld [vmem:[%s225 + $0x160] sm:$0xff]
        %v313 = vld [vmem:[%s225 + $0x168] sm:$0xff]
        %v314 = vld [vmem:[%s225 + $0x170] sm:$0xff]
        %v315 = vld [vmem:[%s225 + $0x178] sm:$0xff]
        %v316 = vld [vmem:[%s225 + $0x180] sm:$0xff]
        %v317 = vld [vmem:[%s225 + $0x188] sm:$0xff]
        %v318 = vld [vmem:[%s225 + $0x190] sm:$0xff]
        %v319 = vld [vmem:[%s225 + $0x198] sm:$0xff]
        %v320 = vld [vmem:[%s225 + $0x1a0] sm:$0xff]
        %v321 = vld [vmem:[%s225 + $0x1a8] sm:$0xff]
        %v322 = vld [vmem:[%s225 + $0x1b0] sm:$0xff]
        %v323 = vld [vmem:[%s225 + $0x1b8] sm:$0xff]
        %v324 = vld [vmem:[%s225 + $0x1c0] sm:$0xff]
        %v325 = vld [vmem:[%s225 + $0x1c8] sm:$0xff]
        %v326 = vld [vmem:[%s225 + $0x1d0] sm:$0xff]
        %v327 = vld [vmem:[%s225 + $0x1d8] sm:$0xff]
        %v328 = vld [vmem:[%s225 + $0x1e0] sm:$0xff]
        %v329 = vld [vmem:[%s225 + $0x1e8] sm:$0xff]
        %v330 = vld [vmem:[%s225 + $0x1f0] sm:$0xff]
        %v331 = vld [vmem:[%s225 + $0x1f8] sm:$0xff]
        %332 = vmatpush.xpose.msra.mxu0 %v328
        %333 = vmatpush.xpose.msra.mxu0 %v324
        %334 = vmatpush.xpose.msra.mxu0 %v320
        %335 = vmatpush.xpose.msra.mxu0 %v316
        %336 = vmatpush.xpose.msra.mxu0 %v312
        %337 = vmatpush.xpose.msra.mxu0 %v308
        %338 = vmatpush.xpose.msra.mxu0 %v304
        %339 = vmatpush.xpose.msra.mxu0 %v300
        %340 = vmatpush.xpose.msra.mxu0 %v296
        %341 = vmatpush.xpose.msra.mxu0 %v292
        %342 = vmatpush.xpose.msra.mxu0 %v288
        %343 = vmatpush.xpose.msra.mxu0 %v284
        %344 = vmatpush.xpose.msra.mxu0 %v280
        %345 = vmatpush.xpose.msra.mxu0 %v276
        %346 = vmatpush.xpose.msra.mxu0 %v272
        %347 = vmatpush.xpose.msra.mxu0 %v268
        %348 = vmatmul.f32.gmra.mxu0 %v264
        %v349 = vpop.f32.mrf.mxu0
        %v350 = vadd.f32 0.0, %v349
        %351 = vdwg.mxu0
        %352 = vmatpush.xpose.msra.mxu0 %v329
        %353 = vmatpush.xpose.msra.mxu0 %v325
        %354 = vmatpush.xpose.msra.mxu0 %v321
        %355 = vmatpush.xpose.msra.mxu0 %v317
        %356 = vmatpush.xpose.msra.mxu0 %v313
        %357 = vmatpush.xpose.msra.mxu0 %v309
        %358 = vmatpush.xpose.msra.mxu0 %v305
        %359 = vmatpush.xpose.msra.mxu0 %v301
        %360 = vmatpush.xpose.msra.mxu0 %v297
        %361 = vmatpush.xpose.msra.mxu0 %v293
        %362 = vmatpush.xpose.msra.mxu0 %v289
        %363 = vmatpush.xpose.msra.mxu0 %v285
        %364 = vmatpush.xpose.msra.mxu0 %v281
        %365 = vmatpush.xpose.msra.mxu0 %v277
        %366 = vmatpush.xpose.msra.mxu0 %v273
        %367 = vmatpush.xpose.msra.mxu0 %v269
        %368 = vmatmul.f32.gmra.mxu0 %v265
        %v369 = vpop.f32.mrf.mxu0
        %v370 = vadd.f32 %v350, %v369
        %371 = vdwg.mxu0
        %372 = vmatpush.xpose.msra.mxu0 %v330
        %373 = vmatpush.xpose.msra.mxu0 %v326
        %374 = vmatpush.xpose.msra.mxu0 %v322
        %375 = vmatpush.xpose.msra.mxu0 %v318
        %376 = vmatpush.xpose.msra.mxu0 %v314
        %377 = vmatpush.xpose.msra.mxu0 %v310
        %378 = vmatpush.xpose.msra.mxu0 %v306
        %379 = vmatpush.xpose.msra.mxu0 %v302
        %380 = vmatpush.xpose.msra.mxu0 %v298
        %381 = vmatpush.xpose.msra.mxu0 %v294
        %382 = vmatpush.xpose.msra.mxu0 %v290
        %383 = vmatpush.xpose.msra.mxu0 %v286
        %384 = vmatpush.xpose.msra.mxu0 %v282
        %385 = vmatpush.xpose.msra.mxu0 %v278
        %386 = vmatpush.xpose.msra.mxu0 %v274
        %387 = vmatpush.xpose.msra.mxu0 %v270
        %388 = vmatmul.f32.gmra.mxu0 %v266
        %v389 = vpop.f32.mrf.mxu0
        %v390 = vadd.f32 %v370, %v389
        %391 = vdwg.mxu0
        %392 = vmatpush.xpose.msra.mxu0 %v331
        %393 = vmatpush.xpose.msra.mxu0 %v327
        %394 = vmatpush.xpose.msra.mxu0 %v323
        %395 = vmatpush.xpose.msra.mxu0 %v319
        %396 = vmatpush.xpose.msra.mxu0 %v315
        %397 = vmatpush.xpose.msra.mxu0 %v311
        %398 = vmatpush.xpose.msra.mxu0 %v307
        %399 = vmatpush.xpose.msra.mxu0 %v303
        %400 = vmatpush.xpose.msra.mxu0 %v299
        %401 = vmatpush.xpose.msra.mxu0 %v295
        %402 = vmatpush.xpose.msra.mxu0 %v291
        %403 = vmatpush.xpose.msra.mxu0 %v287
        %404 = vmatpush.xpose.msra.mxu0 %v283
        %405 = vmatpush.xpose.msra.mxu0 %v279
        %406 = vmatpush.xpose.msra.mxu0 %v275
        %407 = vmatpush.xpose.msra.mxu0 %v271
        %408 = vmatmul.f32.gmra.mxu0 %v267
        %v409 = vpop.f32.mrf.mxu0
        %v410 = vadd.f32 %v390, %v409
        %411 = vdwg.mxu0
        %v412 = vadd.f32 %v263, %v410
        %413 = vst [vmem:[#allocation2] sm:$0xff] %v412
        %p414 = scmp.eq.s32.totalorder %s26, 1
        // Predicated region
        $region45: #{tpu_custom_call.1} parent=31 // pred_check
          %p415 = pneg %p414
        $region46: #{tpu_custom_call.1} parent=31 // pred_check_branch
          %417 = sbr.rel (%p415) target = $region48
        $region47: #{tpu_custom_call.1} parent=31 // pred_region
          %v418 = vld [vmem:[#allocation2] sm:$0xff]
          %v419 = vld [vmem:[%s257] sm:$0x1]
          %v421 = vperm.slane %v419, 0
          %v423 = vadd.f32 %v418, %v421
          %424 = vst [vmem:[#allocation8] sm:$0xff] %v423
        $region48: #{tpu_custom_call.1} parent=31 // pred_fallthru
          _
        // Predicated region
        $region49: #{tpu_custom_call.1} parent=31 // pred_check
          %p425 = pneg %p131
        $region50: #{tpu_custom_call.1} parent=31 // pred_check_branch
          %427 = sbr.rel (%p425) target = $region52
        $region51: #{tpu_custom_call.1} parent=31 // pred_region
          %429 = vsyncadd [#allocation5], 0
          %s430 = smul.addr %s25, 8
          %s431 = scalar_lea.hbm %s3, %s430
          %s433 = sshll.u32 [#allocation8], 4
          %s434 = int_to_ptr.vmem [resolvable:$true] %s433
          %s435 = sshll.u32 %s431, 4
          %s436 = int_to_ptr.hbm [resolvable:$true] %s435
          %438 = dma.vmem_to_hbm [thread:$0]  %s434, 128, %s436, [#allocation5]
        $region52: #{tpu_custom_call.1} parent=31 // pred_fallthru
          _
        // Predicated region
        $region53: #{tpu_custom_call.1} parent=31 // pred_check
          %p439 = pneg %p131
        $region54: #{tpu_custom_call.1} parent=31 // pred_check_branch
          %441 = sbr.rel (%p439) target = $region56
        $region55: #{tpu_custom_call.1} parent=31 // pred_region
          %443 = dma.done [#allocation5], 128
        $region56: #{tpu_custom_call.1} parent=31 // pred_fallthru
          _
      $region32: #{tpu_custom_call.1} parent=5 // pred_fallthru
        _
      %p444 = scmp.le.s32.totalorder 2, %s16
      // Predicated region
      $region57: #{tpu_custom_call.1} parent=5 // pred_check
        %p445 = pneg %p444
      $region58: #{tpu_custom_call.1} parent=5 // pred_check_branch
        %447 = sbr.rel (%p445) target = $region60
      $region59: #{tpu_custom_call.1} parent=5 // pred_region
        %s448 = ssub.s32 %s16, 2
      $region60: #{tpu_custom_call.1} parent=5 // pred_fallthru
        _
    $region6: #{tpu_custom_call.1} parent=1 // loop_footer
      %s20 = sadd.s32 1, %s16
    $region7: #{tpu_custom_call.1} parent=1 // loop_footer_branch
      %15 = sbr.rel target = $region3
    $region8: #{tpu_custom_call.1} parent=1 // loop_exit
      _
    %449 = vsyncpa [#allocation4], 1
    %s450 = scalar_lea.sflag [#allocation4], 1
    %451 = vsyncpa %s450, 1
    %452 = vsyncpa [#allocation7], 1
    %s453 = scalar_lea.sflag [#allocation7], 1
    %454 = vsyncpa %s453, 1
    %455 = vsyncpa [#allocation5], 1
    %s456 = scalar_lea.sflag [#allocation5], 1
    %457 = vsyncpa %s456, 1

</llo_original>
